<compile_context>
chip_gen: v6e
topology: v6e:2x2x1
jax: 0.10.0
libtpu: 0.0.40
codegen_flags: <defaults>
</compile_context>

<pallas_src>
import functools

import jax
import jax.numpy as jnp
from jax import lax
from jax.experimental import pallas as pl
from jax.experimental.pallas import tpu as pltpu


def _round_up(x, m):
    return ((x + m - 1) // m) * m


def _vmem_capacity_bytes():
    """Per-core VMEM capacity; conservative fallback if the query fails."""
    try:
        return int(pltpu.get_tpu_info().vmem_capacity_bytes)
    except Exception:
        return 64 << 20


# ---------------------------------------------------------------------------
# In-kernel top-k along the lane axis.
# ---------------------------------------------------------------------------
def _select_topk(latent, k, latent_dim, exact_ties):
    """sparse = latent at its k largest columns per row, 0 elsewhere.

    Lowest-index tie-break (matches lax.top_k / deterministic torch.topk).
    Columns >= latent_dim are padding and are never selected.
    """
    rows, L_pad = latent.shape
    col_ids = lax.broadcasted_iota(jnp.int32, (rows, L_pad), 1)
    valid = col_ids < latent_dim
    sparse = jnp.zeros_like(latent)

    if exact_ties:
        neg_inf = jnp.float32(-jnp.inf)
        masked = jnp.where(valid, latent, neg_inf)
        for _ in range(k):
            cur_max = jnp.max(masked, axis=1, keepdims=True)       # XLU
            cand = jnp.where(masked == cur_max, col_ids, L_pad)    # VPU
            first = jnp.min(cand, axis=1, keepdims=True)           # XLU
            sel = col_ids == first                                  # VPU
            sparse = jnp.where(sel, latent, sparse)                 # VPU
            masked = jnp.where(sel, neg_inf, masked)                # VPU
    else:
        # One cross-lane reduction per iteration: pack a monotonic int32 float
        # key (high bits) with the inverted column index (low bits) so a single
        # max() finds the winner with lowest-index tie-break.  Values whose
        # keys collide in the truncated high bits (ulp-level) may tie
        # differently than exact top-k.
        imin = jnp.int32(jnp.iinfo(jnp.int32).min)
        idx_bits = max((L_pad - 1).bit_length(), 1)
        bits = pltpu.bitcast(latent, jnp.int32)
        mono = jnp.where(bits >= 0, bits, imin - bits)              # monotonic
        inv_idx = jnp.int32(L_pad - 1) - col_ids
        key = (mono & jnp.int32(-(1 << idx_bits))) | inv_idx
        key = jnp.where(valid, key, imin)
        for _ in range(k):
            win = jnp.max(key, axis=1, keepdims=True)               # XLU (only)
            sel = key == win                                         # VPU
            sparse = jnp.where(sel, latent, sparse)                  # VPU
            key = jnp.where(sel, imin, key)                          # VPU
    return sparse


# ---------------------------------------------------------------------------
# Kernels.
# ---------------------------------------------------------------------------
def _sae_resident_kernel(x_ref, enc_ref, dec_ref, recon_ref, sparse_ref, *,
                         k, use_topk, latent_dim, exact_ties):
    # x_ref:      (bm, in_p)    bf16
    # enc_ref:    (in_p, L_p)   bf16, resident (single-buffered)
    # dec_ref:    (L_p, hid_p)  bf16, resident (single-buffered)
    # recon_ref:  (bm, hid_p)   out dtype
    # sparse_ref: (bm, L_p)     out dtype
    latent = jnp.dot(x_ref[...], enc_ref[...],
                     preferred_element_type=jnp.float32)
    sparse = _select_topk(latent, k, latent_dim, exact_ties) if use_topk else latent
    sparse_c = sparse.astype(sparse_ref.dtype)   # fused cast: stored value is
    sparse_ref[...] = sparse_c                   # the decoder-matmul operand
    recon_ref[...] = jnp.dot(sparse_c.astype(dec_ref.dtype), dec_ref[...],
                             preferred_element_type=jnp.float32
                             ).astype(recon_ref.dtype)


def _sae_streamed_kernel(x_ref, enc_ref, dec_ref, recon_ref, sparse_ref,
                         latent_sc, acc_sc, *,
                         k, use_topk, latent_dim, exact_ties, tl, n_l):
    # grid = (n_b, 2, n_l); p = phase, l = latent tile.
    # x_ref:      (bm, in_p)   bf16 (constant per batch tile)
    # enc_ref:    (in_p, tl)   bf16 column tile, streamed in phase 0
    # dec_ref:    (tl, hid_p)  bf16 row tile, streamed in phase 1
    # recon_ref:  (bm, hid_p)  out dtype, written at the last phase-1 step
    # sparse_ref: (bm, tl)     out dtype, one tile per phase-1 step
    # latent_sc:  (bm, L_p)    f32 full latent row block (scratch)
    # acc_sc:     (bm, hid_p)  f32 recon accumulator (scratch)
    p = pl.program_id(1)
    l = pl.program_id(2)
    off = pl.multiple_of(l * tl, tl)

    @pl.when(p == 0)
    def _():
        latent_sc[:, pl.ds(off, tl)] = jnp.dot(
            x_ref[...], enc_ref[...], preferred_element_type=jnp.float32)

    @pl.when(p == 1)
    def _():
        @pl.when(l == 0)
        def _():
            # Full latent row block is resident: run top-k once, overwrite the
            # scratch with the sparse result in place.
            if use_topk:
                latent_sc[...] = _select_topk(latent_sc[...], k, latent_dim,
                                              exact_ties)
            acc_sc[...] = jnp.zeros_like(acc_sc)

        sp_tile = latent_sc[:, pl.ds(off, tl)].astype(sparse_ref.dtype)
        sparse_ref[...] = sp_tile
        acc_sc[...] += jnp.dot(sp_tile.astype(dec_ref.dtype), dec_ref[...],
                               preferred_element_type=jnp.float32)

        @pl.when(l == n_l - 1)
        def _():
            recon_ref[...] = acc_sc[...].astype(recon_ref.dtype)


# ---------------------------------------------------------------------------
# Wrapper / factory.
# ---------------------------------------------------------------------------
def make_faithful_sae(encoder, decoder, *, k=1, use_topk=True, bm=None, tl=None,
                      compute_dtype=jnp.bfloat16, out_dtype=None,
                      exact_ties=True):
    """Prepare a Faithful_SAE forward pass.

    Pads/casts the weights ONCE (hoisted out of the per-call path) and returns
    forward(x) -> (reconstructed, sparse) of shapes (B, hidden_dim) /
    (B, latent_dim) in `out_dtype` (default: compute_dtype, i.e. bf16, to halve
    HBM writeback; pass out_dtype=jnp.float32 for f32 outputs).

    `tl` (latent tile, multiple of 128) forces the latent-dim streaming path;
    when None it is picked automatically iff the resident-weight path does not
    fit the per-core VMEM budget.
    """
    encoder = jnp.asarray(encoder)
    decoder = jnp.asarray(decoder)
    input_dim, latent_dim = encoder.shape
    latent_dim_d, hidden_dim = decoder.shape
    if latent_dim != latent_dim_d:
        raise ValueError("encoder/decoder latent dims disagree")
    if use_topk and not (1 <= k <= latent_dim):
        raise ValueError("top-k requires 1 <= k <= latent_dim")
    if out_dtype is None:
        out_dtype = compute_dtype

    cbytes = jnp.dtype(compute_dtype).itemsize
    obytes = jnp.dtype(out_dtype).itemsize

    in_p = _round_up(input_dim, 128)
    hid_p = _round_up(hidden_dim, 128)

    # Generation-aware budget (~104 MiB on 128 MiB parts, ~56 MiB on v7x).
    cap = _vmem_capacity_bytes()
    hard_cap = max(32 << 20,
                   cap - ((8 << 20) if cap <= (64 << 20) else (24 << 20)))

    bm_cap = 256  # worst-case batch tile, used only for the residency decision

    def _resident_bytes(L_pad):
        return (2 * bm_cap * in_p * cbytes          # x tiles (double-buffered)
                + in_p * L_pad * cbytes             # encoder (single-buffered)
                + L_pad * hid_p * cbytes            # decoder (single-buffered)
                + 2 * bm_cap * L_pad * obytes       # sparse tiles
                + 2 * bm_cap * hid_p * obytes       # recon tiles
                + (4 << 20))                        # headroom

    def _streamed_bytes(L_pad, tile_l):
        return (2 * bm_cap * in_p * cbytes
                + 2 * in_p * tile_l * cbytes        # encoder column tiles
                + 2 * tile_l * hid_p * cbytes       # decoder row tiles
                + 2 * bm_cap * tile_l * obytes      # sparse tiles
                + 2 * bm_cap * hid_p * obytes       # recon tiles
                + bm_cap * L_pad * 4                # latent scratch
                + bm_cap * hid_p * 4                # recon accumulator
                + (4 << 20))

    if tl is None and _resident_bytes(_round_up(latent_dim, 128)) <= hard_cap:
        mode = "resident"
        L_p = _round_up(latent_dim, 128)
        n_l = 1
    else:
        mode = "streamed"
        if tl is None:
            for cand in (2048, 1024, 512, 256, 128):
                if _streamed_bytes(_round_up(latent_dim, cand), cand) <= hard_cap:
                    tl = cand
                    break
            if tl is None:
                raise NotImplementedError(
                    "Faithful_SAE shape too large for the streamed kernel's "
                    "VMEM budget; input-dim tiling not implemented yet.")
        if tl % 128 != 0:
            raise ValueError("tl must be a multiple of 128")
        L_p = _round_up(latent_dim, tl)
        n_l = L_p // tl

    # Pad + cast the weights ONCE (hoisted out of the per-call forward).
    enc_c = jnp.pad(encoder.astype(compute_dtype),
                    ((0, in_p - input_dim), (0, L_p - latent_dim)))
    dec_c = jnp.pad(decoder.astype(compute_dtype),
                    ((0, L_p - latent_dim), (0, hid_p - hidden_dim)))

    topk_kwargs = dict(k=k, use_topk=use_topk, latent_dim=latent_dim,
                       exact_ties=exact_ties)

    def _forward_impl(x, enc_w, dec_w, *, single_buffer):
        B = x.shape[0]
        if bm is not None:
            bm_ = max(16, _round_up(bm, 16))
        else:
            # <=256 rows, sublane aligned; >=2 grid tiles whenever B allows so
            # the "parallel" axis can shard across v7x's two TensorCores.
            B16 = _round_up(max(B, 1), 16)
            bm_ = 256 if B16 > 512 else max(16, _round_up((B16 + 1) // 2, 16))
        B_p = _round_up(B, bm_)
        n_b = B_p // bm_

        x_c = jnp.pad(x.astype(compute_dtype),
                      ((0, B_p - B), (0, in_p - input_dim)))
        out_shape = (jax.ShapeDtypeStruct((B_p, hid_p), out_dtype),
                     jax.ShapeDtypeStruct((B_p, L_p), out_dtype))

        if mode == "resident":
            weight_kw = (dict(pipeline_mode=pl.Buffered(1))
                         if single_buffer else {})
            wbuf = 1 if single_buffer else 2
            vmem_bytes = (2 * bm_ * in_p * cbytes
                          + wbuf * in_p * L_p * cbytes
                          + wbuf * L_p * hid_p * cbytes
                          + 2 * bm_ * L_p * obytes
                          + 2 * bm_ * hid_p * obytes
                          + (4 << 20))
            kernel = functools.partial(_sae_resident_kernel, **topk_kwargs)
            recon_p, sparse_p = pl.pallas_call(
                kernel,
                out_shape=out_shape,
                grid_spec=pltpu.PrefetchScalarGridSpec(
                    num_scalar_prefetch=0,
                    grid=(n_b,),
                    in_specs=[
                        pl.BlockSpec((bm_, in_p), lambda i: (i, 0)),
                        pl.BlockSpec((in_p, L_p), lambda i: (0, 0), **weight_kw),
                        pl.BlockSpec((L_p, hid_p), lambda i: (0, 0), **weight_kw),
                    ],
                    out_specs=[
                        pl.BlockSpec((bm_, hid_p), lambda i: (i, 0)),
                        pl.BlockSpec((bm_, L_p), lambda i: (i, 0)),
                    ],
                ),
                compiler_params=pltpu.CompilerParams(
                    dimension_semantics=("parallel",),
                    vmem_limit_bytes=int(min(max(vmem_bytes, 32 << 20),
                                             hard_cap))),
            )(x_c, enc_w, dec_w)
        else:
            vmem_bytes = (2 * bm_ * in_p * cbytes
                          + 2 * in_p * tl * cbytes
                          + 2 * tl * hid_p * cbytes
                          + 2 * bm_ * tl * obytes
                          + 2 * bm_ * hid_p * obytes
                          + bm_ * L_p * 4
                          + bm_ * hid_p * 4
                          + (4 << 20))
            kernel = functools.partial(_sae_streamed_kernel, tl=tl, n_l=n_l,
                                       **topk_kwargs)
            recon_p, sparse_p = pl.pallas_call(
                kernel,
                out_shape=out_shape,
                grid_spec=pltpu.PrefetchScalarGridSpec(
                    num_scalar_prefetch=0,
                    grid=(n_b, 2, n_l),
                    in_specs=[
                        pl.BlockSpec((bm_, in_p), lambda i, p, l: (i, 0)),
                        # phase 0: stream encoder column tiles; phase 1: hold
                        # the last tile (constant index -> no refetch).
                        pl.BlockSpec((in_p, tl),
                                     lambda i, p, l: (0, (1 - p) * l
                                                      + p * (n_l - 1))),
                        # phase 0: hold decoder tile 0; phase 1: stream rows.
                        pl.BlockSpec((tl, hid_p), lambda i, p, l: (p * l, 0)),
                    ],
                    out_specs=[
                        pl.BlockSpec((bm_, hid_p), lambda i, p, l: (i, 0)),
                        pl.BlockSpec((bm_, tl), lambda i, p, l: (i, p * l)),
                    ],
                    scratch_shapes=[
                        pltpu.VMEM((bm_, L_p), jnp.float32),    # latent block
                        pltpu.VMEM((bm_, hid_p), jnp.float32),  # recon acc
                    ],
                ),
                compiler_params=pltpu.CompilerParams(
                    dimension_semantics=("parallel", "arbitrary", "arbitrary"),
                    vmem_limit_bytes=int(min(max(vmem_bytes, 32 << 20),
                                             hard_cap))),
            )(x_c, enc_w, dec_w)

        return recon_p[:B, :hidden_dim], sparse_p[:B, :latent_dim]

    _fwd_sb = jax.jit(functools.partial(_forward_impl, single_buffer=True))
    _fwd_db = jax.jit(functools.partial(_forward_impl, single_buffer=False))
    _single_buffer = [True]

    def forward(x):
        if _single_buffer[0]:
            try:
                return _fwd_sb(x, enc_c, dec_c)
            except Exception:
                if mode != "resident":
                    raise
                # Fallback if this jax build rejects pipeline_mode=Buffered(1).
                _single_buffer[0] = False
        return _fwd_db(x, enc_c, dec_c)

    return forward


def faithful_sae_forward(x, encoder, decoder, *, k=1, use_topk=True, **kwargs):
    """One-shot convenience wrapper (pads/casts weights on every call; prefer
    make_faithful_sae for repeated use)."""
    return make_faithful_sae(encoder, decoder, k=k, use_topk=use_topk,
                             **kwargs)(x)


# ---------------------------------------------------------------------------
# Reference + self-test.
# ---------------------------------------------------------------------------
def _xavier_normal(key, fan_in, fan_out):
    std = (2.0 / (fan_in + fan_out)) ** 0.5
    return std * jax.random.normal(key, (fan_in, fan_out), dtype=jnp.float32)


def _reference_forward(x, encoder, decoder, k, use_topk,
                       compute_dtype=jnp.bfloat16):
    # Same numerics policy as the kernel: bf16 operands, f32 accumulation.
    latent = jnp.dot(x.astype(compute_dtype), encoder.astype(compute_dtype),
                     preferred_element_type=jnp.float32)
    if use_topk:
        vals, idx = lax.top_k(latent, k)
        sparse = jax.vmap(lambda s, i, v: s.at[i].set(v))(
            jnp.zeros_like(latent), idx, vals)
    else:
        sparse = latent
    recon = jnp.dot(sparse.astype(compute_dtype), decoder.astype(compute_dtype),
                    preferred_element_type=jnp.float32)
    return recon, sparse


def _check(name, got, want, atol=2e-2, rtol=2e-2):
    got = jnp.asarray(got, jnp.float32)
    want = jnp.asarray(want, jnp.float32)
    if not jnp.allclose(got, want, atol=atol, rtol=rtol):
        raise AssertionError(
            f"{name}: max abs err {float(jnp.max(jnp.abs(got - want)))}")


if __name__ == "__main__":
    key = jax.random.PRNGKey(0)
    k_x, k_e, k_d, k_x2, k_e2, k_d2 = jax.random.split(key, 6)

    # ---- resident-weight path: input=16, latent=32, hidden=16, batch=8, k=2
    B, Din, L, Dh, K = 8, 16, 32, 16, 2
    x = jax.random.normal(k_x, (B, Din), dtype=jnp.float32)
    enc = _xavier_normal(k_e, Din, L)
    dec = _xavier_normal(k_d, L, Dh)
    ref_r, ref_s = _reference_forward(x, enc, dec, K, True)

    fwd = make_faithful_sae(enc, dec, k=K, use_topk=True)
    recon, sparse = fwd(x)
    jax.block_until_ready((recon, sparse))
    assert recon.shape == (B, Dh) and sparse.shape == (B, L)
    _check("recon (resident)", recon, ref_r)
    _check("sparse (resident)", sparse, ref_s)

    # Packed-key top-k variant (one cross-lane reduction per iteration).
    recon_pk, sparse_pk = make_faithful_sae(enc, dec, k=K, use_topk=True,
                                            exact_ties=False)(x)
    _check("recon (packed-key)", recon_pk, ref_r)
    _check("sparse (packed-key)", sparse_pk, ref_s)

    # use_topk=False path.
    ref_r_nt, ref_s_nt = _reference_forward(x, enc, dec, K, False)
    recon_nt, sparse_nt = make_faithful_sae(enc, dec, k=K, use_topk=False)(x)
    _check("recon (no topk)", recon_nt, ref_r_nt)
    _check("sparse (no topk)", sparse_nt, ref_s_nt)

    # ---- latent-dim streamed path (forced with tl=128): latent=320, k=4
    B2, Din2, L2, Dh2, K2 = 8, 16, 320, 24, 4
    x2 = jax.random.normal(k_x2, (B2, Din2), dtype=jnp.float32)
    enc2 = _xavier_normal(k_e2, Din2, L2)
    dec2 = _xavier_normal(k_d2, L2, Dh2)
    ref_r2, ref_s2 = _reference_forward(x2, enc2, dec2, K2, True)

    fwd_st = make_faithful_sae(enc2, dec2, k=K2, use_topk=True, tl=128)
    recon2, sparse2 = fwd_st(x2)
    jax.block_until_ready((recon2, sparse2))
    assert recon2.shape == (B2, Dh2) and sparse2.shape == (B2, L2)
    _check("recon (streamed)", recon2, ref_r2)
    _check("sparse (streamed)", sparse2, ref_s2)

    print("KERNEL_OK")
</pallas_src>

<mosaic_0001>
module attributes {stable_mosaic.version = 11 : i64} {
  func.func @_sae_resident_kernel(%arg0: i32, %arg1: memref<16x128xbf16, #tpu.memory_space<vmem>>, %arg2: memref<128x128xbf16, #tpu.memory_space<vmem>>, %arg3: memref<128x128xbf16, #tpu.memory_space<vmem>>, %arg4: memref<16x128xbf16, #tpu.memory_space<vmem>>, %arg5: memref<16x128xbf16, #tpu.memory_space<vmem>>) attributes {dimension_semantics = [#tpu.dimension_semantics<parallel>], iteration_bounds = array<i64: 1>, scalar_prefetch = 0 : i64, scratch_operands = 0 : i64, tpu.core_type = #tpu.core_type<tc>, window_params = [{transform_indices = @transform_0, window_bounds = array<i64: 16, 128>}, {pipeline_mode = #tpu.pipeline_mode<synchronous>, transform_indices = @transform_1, window_bounds = array<i64: 128, 128>}, {pipeline_mode = #tpu.pipeline_mode<synchronous>, transform_indices = @transform_2, window_bounds = array<i64: 128, 128>}, {transform_indices = @transform_3, window_bounds = array<i64: 16, 128>}, {transform_indices = @transform_4, window_bounds = array<i64: 16, 128>}]} {
    %c0 = arith.constant 0 : index
    %c0_0 = arith.constant 0 : index
    %0 = vector.load %arg1[%c0, %c0_0] : memref<16x128xbf16, #tpu.memory_space<vmem>>, vector<16x128xbf16>
    %c0_1 = arith.constant 0 : index
    %c0_2 = arith.constant 0 : index
    %1 = vector.load %arg2[%c0_1, %c0_2] : memref<128x128xbf16, #tpu.memory_space<vmem>>, vector<128x128xbf16>
    %cst = arith.constant dense<0.000000e+00> : vector<16x128xf32>
    %2 = tpu.matmul %0, %1, %cst {dimension_numbers = #tpu.dot_dimension_numbers<[1], [0], [0], [1], [0, 0, 1, 1], [], []>} : vector<16x128xbf16>, vector<128x128xbf16>, vector<16x128xf32> -> vector<16x128xf32>
    %3 = tpu.iota {dimensions = array<i32: 1>} : vector<16x128xi32>
    %c32_i32 = arith.constant 32 : i32
    %4 = vector.broadcast %c32_i32 : i32 to vector<16x128xi32>
    %5 = arith.cmpi slt, %3, %4 : vector<16x128xi32>
    %cst_3 = arith.constant 0.000000e+00 : f32
    %6 = vector.broadcast %cst_3 : f32 to vector<16x128xf32>
    %cst_4 = arith.constant 0xFF800000 : f32
    %7 = vector.broadcast %cst_4 : f32 to vector<16x128xf32>
    %8 = arith.select %5, %2, %7 : vector<16x128xi1>, vector<16x128xf32>
    %cst_5 = arith.constant dense<0xFF800000> : vector<16xf32>
    %9 = vector.multi_reduction <maximumf>, %8, %cst_5 [1] : vector<16x128xf32> to vector<16xf32>
    %10 = vector.shape_cast %9 : vector<16xf32> to vector<16x1xf32>
    %11 = vector.broadcast %10 : vector<16x1xf32> to vector<16x128xf32>
    %12 = arith.cmpf oeq, %8, %11 : vector<16x128xf32>
    %c128_i32 = arith.constant 128 : i32
    %13 = vector.broadcast %c128_i32 : i32 to vector<16x128xi32>
    %14 = arith.select %12, %3, %13 : vector<16x128xi1>, vector<16x128xi32>
    %cst_6 = arith.constant dense<2147483647> : vector<16xi32>
    %15 = vector.multi_reduction <minsi>, %14, %cst_6 [1] : vector<16x128xi32> to vector<16xi32>
    %16 = vector.shape_cast %15 : vector<16xi32> to vector<16x1xi32>
    %17 = vector.broadcast %16 : vector<16x1xi32> to vector<16x128xi32>
    %18 = arith.cmpi eq, %3, %17 : vector<16x128xi32>
    %19 = arith.select %18, %2, %6 : vector<16x128xi1>, vector<16x128xf32>
    %cst_7 = arith.constant 0xFF800000 : f32
    %20 = vector.broadcast %cst_7 : f32 to vector<16x128xf32>
    %21 = arith.select %18, %20, %8 : vector<16x128xi1>, vector<16x128xf32>
    %cst_8 = arith.constant dense<0xFF800000> : vector<16xf32>
    %22 = vector.multi_reduction <maximumf>, %21, %cst_8 [1] : vector<16x128xf32> to vector<16xf32>
    %23 = vector.shape_cast %22 : vector<16xf32> to vector<16x1xf32>
    %24 = vector.broadcast %23 : vector<16x1xf32> to vector<16x128xf32>
    %25 = arith.cmpf oeq, %21, %24 : vector<16x128xf32>
    %c128_i32_9 = arith.constant 128 : i32
    %26 = vector.broadcast %c128_i32_9 : i32 to vector<16x128xi32>
    %27 = arith.select %25, %3, %26 : vector<16x128xi1>, vector<16x128xi32>
    %cst_10 = arith.constant dense<2147483647> : vector<16xi32>
    %28 = vector.multi_reduction <minsi>, %27, %cst_10 [1] : vector<16x128xi32> to vector<16xi32>
    %29 = vector.shape_cast %28 : vector<16xi32> to vector<16x1xi32>
    %30 = vector.broadcast %29 : vector<16x1xi32> to vector<16x128xi32>
    %31 = arith.cmpi eq, %3, %30 : vector<16x128xi32>
    %32 = arith.select %31, %2, %19 : vector<16x128xi1>, vector<16x128xf32>
    %33 = arith.truncf %32 : vector<16x128xf32> to vector<16x128xbf16>
    %c0_11 = arith.constant 0 : index
    %c0_12 = arith.constant 0 : index
    %34 = vector.load %arg5[%c0_11, %c0_12] : memref<16x128xbf16, #tpu.memory_space<vmem>>, vector<16x128xbf16>
    tpu.vector_store %arg5[%c0_11, %c0_12], %33 {strides = array<i32>} : memref<16x128xbf16, #tpu.memory_space<vmem>>, vector<16x128xbf16>,
    %c0_13 = arith.constant 0 : index
    %c0_14 = arith.constant 0 : index
    %35 = vector.load %arg3[%c0_13, %c0_14] : memref<128x128xbf16, #tpu.memory_space<vmem>>, vector<128x128xbf16>
    %cst_15 = arith.constant dense<0.000000e+00> : vector<16x128xf32>
    %36 = tpu.matmul %33, %35, %cst_15 {dimension_numbers = #tpu.dot_dimension_numbers<[1], [0], [0], [1], [0, 0, 1, 1], [], []>} : vector<16x128xbf16>, vector<128x128xbf16>, vector<16x128xf32> -> vector<16x128xf32>
    %37 = arith.truncf %36 : vector<16x128xf32> to vector<16x128xbf16>
    %c0_16 = arith.constant 0 : index
    %c0_17 = arith.constant 0 : index
    %38 = vector.load %arg4[%c0_16, %c0_17] : memref<16x128xbf16, #tpu.memory_space<vmem>>, vector<16x128xbf16>
    tpu.vector_store %arg4[%c0_16, %c0_17], %37 {strides = array<i32>} : memref<16x128xbf16, #tpu.memory_space<vmem>>, vector<16x128xbf16>,
    return
  }
  func.func @transform_0(%arg0: i32) -> (i32, i32) {
    %c0_i32 = arith.constant 0 : i32
    %c0_i32_0 = arith.constant 0 : i32
    return %arg0, %c0_i32 : i32, i32
  }
  func.func @transform_1(%arg0: i32) -> (i32, i32) {
    %c0_i32 = arith.constant 0 : i32
    %c0_i32_0 = arith.constant 0 : i32
    %c0_i32_1 = arith.constant 0 : i32
    return %c0_i32, %c0_i32_0 : i32, i32
  }
  func.func @transform_2(%arg0: i32) -> (i32, i32) {
    %c0_i32 = arith.constant 0 : i32
    %c0_i32_0 = arith.constant 0 : i32
    %c0_i32_1 = arith.constant 0 : i32
    return %c0_i32, %c0_i32_0 : i32, i32
  }
  func.func @transform_3(%arg0: i32) -> (i32, i32) {
    %c0_i32 = arith.constant 0 : i32
    %c0_i32_0 = arith.constant 0 : i32
    return %arg0, %c0_i32 : i32, i32
  }
  func.func @transform_4(%arg0: i32) -> (i32, i32) {
    %c0_i32 = arith.constant 0 : i32
    %c0_i32_0 = arith.constant 0 : i32
    return %arg0, %c0_i32 : i32, i32
  }
}

module attributes {stable_mosaic.version = 11 : i64} {
  func.func @_sae_resident_kernel(%arg0: i32, %arg1: memref<16x128xbf16, #tpu.memory_space<vmem>>, %arg2: memref<128x128xbf16, #tpu.memory_space<vmem>>, %arg3: memref<128x128xbf16, #tpu.memory_space<vmem>>, %arg4: memref<16x128xbf16, #tpu.memory_space<vmem>>, %arg5: memref<16x128xbf16, #tpu.memory_space<vmem>>) attributes {dimension_semantics = [#tpu.dimension_semantics<parallel>], iteration_bounds = array<i64: 1>, scalar_prefetch = 0 : i64, scratch_operands = 0 : i64, tpu.core_type = #tpu.core_type<tc>, window_params = [{transform_indices = @transform_0, window_bounds = array<i64: 16, 128>}, {pipeline_mode = #tpu.pipeline_mode<synchronous>, transform_indices = @transform_1, window_bounds = array<i64: 128, 128>}, {pipeline_mode = #tpu.pipeline_mode<synchronous>, transform_indices = @transform_2, window_bounds = array<i64: 128, 128>}, {transform_indices = @transform_3, window_bounds = array<i64: 16, 128>}, {transform_indices = @transform_4, window_bounds = array<i64: 16, 128>}]} {
    %c0 = arith.constant 0 : index
    %c0_0 = arith.constant 0 : index
    %0 = vector.load %arg1[%c0, %c0_0] : memref<16x128xbf16, #tpu.memory_space<vmem>>, vector<16x128xbf16>
    %c0_1 = arith.constant 0 : index
    %c0_2 = arith.constant 0 : index
    %1 = vector.load %arg2[%c0_1, %c0_2] : memref<128x128xbf16, #tpu.memory_space<vmem>>, vector<128x128xbf16>
    %cst = arith.constant dense<0.000000e+00> : vector<16x128xf32>
    %2 = tpu.matmul %0, %1, %cst {dimension_numbers = #tpu.dot_dimension_numbers<[1], [0], [0], [1], [0, 0, 1, 1], [], []>} : vector<16x128xbf16>, vector<128x128xbf16>, vector<16x128xf32> -> vector<16x128xf32>
    %3 = tpu.iota {dimensions = array<i32: 1>} : vector<16x128xi32>
    %c32_i32 = arith.constant 32 : i32
    %4 = vector.broadcast %c32_i32 : i32 to vector<16x128xi32>
    %5 = arith.cmpi slt, %3, %4 : vector<16x128xi32>
    %cst_3 = arith.constant 0.000000e+00 : f32
    %6 = vector.broadcast %cst_3 : f32 to vector<16x128xf32>
    %cst_4 = arith.constant 0xFF800000 : f32
    %7 = vector.broadcast %cst_4 : f32 to vector<16x128xf32>
    %8 = arith.select %5, %2, %7 : vector<16x128xi1>, vector<16x128xf32>
    %cst_5 = arith.constant dense<0xFF800000> : vector<16xf32>
    %9 = vector.multi_reduction <maximumf>, %8, %cst_5 [1] : vector<16x128xf32> to vector<16xf32>
    %10 = vector.shape_cast %9 : vector<16xf32> to vector<16x1xf32>
    %11 = vector.broadcast %10 : vector<16x1xf32> to vector<16x128xf32>
    %12 = arith.cmpf oeq, %8, %11 : vector<16x128xf32>
    %c128_i32 = arith.constant 128 : i32
    %13 = vector.broadcast %c128_i32 : i32 to vector<16x128xi32>
    %14 = arith.select %12, %3, %13 : vector<16x128xi1>, vector<16x128xi32>
    %cst_6 = arith.constant dense<2147483647> : vector<16xi32>
    %15 = vector.multi_reduction <minsi>, %14, %cst_6 [1] : vector<16x128xi32> to vector<16xi32>
    %16 = vector.shape_cast %15 : vector<16xi32> to vector<16x1xi32>
    %17 = vector.broadcast %16 : vector<16x1xi32> to vector<16x128xi32>
    %18 = arith.cmpi eq, %3, %17 : vector<16x128xi32>
    %19 = arith.select %18, %2, %6 : vector<16x128xi1>, vector<16x128xf32>
    %cst_7 = arith.constant 0xFF800000 : f32
    %20 = vector.broadcast %cst_7 : f32 to vector<16x128xf32>
    %21 = arith.select %18, %20, %8 : vector<16x128xi1>, vector<16x128xf32>
    %cst_8 = arith.constant dense<0xFF800000> : vector<16xf32>
    %22 = vector.multi_reduction <maximumf>, %21, %cst_8 [1] : vector<16x128xf32> to vector<16xf32>
    %23 = vector.shape_cast %22 : vector<16xf32> to vector<16x1xf32>
    %24 = vector.broadcast %23 : vector<16x1xf32> to vector<16x128xf32>
    %25 = arith.cmpf oeq, %21, %24 : vector<16x128xf32>
    %c128_i32_9 = arith.constant 128 : i32
    %26 = vector.broadcast %c128_i32_9 : i32 to vector<16x128xi32>
    %27 = arith.select %25, %3, %26 : vector<16x128xi1>, vector<16x128xi32>
    %cst_10 = arith.constant dense<2147483647> : vector<16xi32>
    %28 = vector.multi_reduction <minsi>, %27, %cst_10 [1] : vector<16x128xi32> to vector<16xi32>
    %29 = vector.shape_cast %28 : vector<16xi32> to vector<16x1xi32>
    %30 = vector.broadcast %29 : vector<16x1xi32> to vector<16x128xi32>
    %31 = arith.cmpi eq, %3, %30 : vector<16x128xi32>
    %32 = arith.select %31, %2, %19 : vector<16x128xi1>, vector<16x128xf32>
    %33 = arith.truncf %32 : vector<16x128xf32> to vector<16x128xbf16>
    %c0_11 = arith.constant 0 : index
    %c0_12 = arith.constant 0 : index
    %34 = vector.load %arg5[%c0_11, %c0_12] : memref<16x128xbf16, #tpu.memory_space<vmem>>, vector<16x128xbf16>
    tpu.vector_store %arg5[%c0_11, %c0_12], %33 {strides = array<i32>} : memref<16x128xbf16, #tpu.memory_space<vmem>>, vector<16x128xbf16>,
    %c0_13 = arith.constant 0 : index
    %c0_14 = arith.constant 0 : index
    %35 = vector.load %arg3[%c0_13, %c0_14] : memref<128x128xbf16, #tpu.memory_space<vmem>>, vector<128x128xbf16>
    %cst_15 = arith.constant dense<0.000000e+00> : vector<16x128xf32>
    %36 = tpu.matmul %33, %35, %cst_15 {dimension_numbers = #tpu.dot_dimension_numbers<[1], [0], [0], [1], [0, 0, 1, 1], [], []>} : vector<16x128xbf16>, vector<128x128xbf16>, vector<16x128xf32> -> vector<16x128xf32>
    %37 = arith.truncf %36 : vector<16x128xf32> to vector<16x128xbf16>
    %c0_16 = arith.constant 0 : index
    %c0_17 = arith.constant 0 : index
    %38 = vector.load %arg4[%c0_16, %c0_17] : memref<16x128xbf16, #tpu.memory_space<vmem>>, vector<16x128xbf16>
    tpu.vector_store %arg4[%c0_16, %c0_17], %37 {strides = array<i32>} : memref<16x128xbf16, #tpu.memory_space<vmem>>, vector<16x128xbf16>,
    return
  }
  func.func @transform_0(%arg0: i32) -> (i32, i32) {
    %c0_i32 = arith.constant 0 : i32
    %c0_i32_0 = arith.constant 0 : i32
    return %arg0, %c0_i32 : i32, i32
  }
  func.func @transform_1(%arg0: i32) -> (i32, i32) {
    %c0_i32 = arith.constant 0 : i32
    %c0_i32_0 = arith.constant 0 : i32
    %c0_i32_1 = arith.constant 0 : i32
    return %c0_i32, %c0_i32_0 : i32, i32
  }
  func.func @transform_2(%arg0: i32) -> (i32, i32) {
    %c0_i32 = arith.constant 0 : i32
    %c0_i32_0 = arith.constant 0 : i32
    %c0_i32_1 = arith.constant 0 : i32
    return %c0_i32, %c0_i32_0 : i32, i32
  }
  func.func @transform_3(%arg0: i32) -> (i32, i32) {
    %c0_i32 = arith.constant 0 : i32
    %c0_i32_0 = arith.constant 0 : i32
    return %arg0, %c0_i32 : i32, i32
  }
  func.func @transform_4(%arg0: i32) -> (i32, i32) {
    %c0_i32 = arith.constant 0 : i32
    %c0_i32_0 = arith.constant 0 : i32
    return %arg0, %c0_i32 : i32, i32
  }
}

</mosaic_0001>

<llo_original>
// kernel: _forward_impl.1
$region0: #{_forward_impl.1}
  #allocation0 [shape = 'u32[]', space=smem, size = 0x4, offset = 0x4, fixed_abs, tag = 'smem constant byte address 0x4 - core index']
  #allocation1 [shape = 'u32[144,128]{1,0:T(1,128)}', space=vmem, size = 0x12000, scoped, tag = 'internal scratch']
  %s0 = inlined_call_operand.vmem [shape: bf16[16,128], index: 0, kind: input, shape index: {}]
  %s1 = inlined_call_operand.hbm [shape: bf16[128,128], index: 1, kind: input, shape index: {}]
  %s2 = inlined_call_operand.hbm [shape: bf16[128,128], index: 2, kind: input, shape index: {}]
  %s3 = inlined_call_operand.vmem [shape: bf16[16,128], index: 3, kind: output, shape index: {0}]
  %s4 = inlined_call_operand.vmem [shape: bf16[16,128], index: 4, kind: output, shape index: {1}]
  %5 = xla_tuple %s3, %s4
  %s6 = sld [smem:[#allocation0]]
  $region38: #{_forward_impl.1} parent=0
    _
  %s8 = ssub.s32 1, %s6
  %s9 = scalar_select 0, %s8, %s6
  $region1: #{_forward_impl.1} parent=0
    #allocation2 [shape = 'u8[32768]{0}', space=vmem, size = 0x8000, scoped, tag = 'input window, operand 1, single buffered']
    #allocation3 [shape = 's32[1]{0}', space=sflag, size = 0x4, scoped, tag = 'scoped memory for _forward_impl.1']
    #allocation4 [shape = 'u8[32768]{0}', space=vmem, size = 0x8000, scoped, tag = 'input window, operand 2, single buffered']
    #allocation5 [shape = 's32[1]{0}', space=sflag, size = 0x4, scoped, tag = 'scoped memory for _forward_impl.1']
    %10 = vsyncpa [#allocation3], 0
    %11 = vsyncpa [#allocation5], 0
    // Predicated region
    $region2: #{_forward_impl.1} parent=1 // pred_check
      _
    $region3: #{_forward_impl.1} parent=1 // pred_check_branch
      %13 = sbr.rel (0) target = $region5
    $region4: #{_forward_impl.1} parent=1 // pred_region
      _
    $region5: #{_forward_impl.1} parent=1 // pred_fallthru
      _
    // Predicated region
    $region6: #{_forward_impl.1} parent=1 // pred_check
      _
    $region7: #{_forward_impl.1} parent=1 // pred_check_branch
      %15 = sbr.rel (0) target = $region9
    $region8: #{_forward_impl.1} parent=1 // pred_region
      %s17 = ssub.s32 1024, 1024
      %18 = vsyncadd [#allocation3], %s17
      %s19 = sshll.u32 [#allocation2], 4
      %s20 = int_to_ptr.vmem [resolvable:$true] %s19
      %25 = dma.hbm_to_vmem [thread:$0]  %s1, 1024, %s20, [#allocation3], 64, 64, 4
    $region9: #{_forward_impl.1} parent=1 // pred_fallthru
      _
    // Predicated region
    $region10: #{_forward_impl.1} parent=1 // pred_check
      _
    $region11: #{_forward_impl.1} parent=1 // pred_check_branch
      %27 = sbr.rel (0) target = $region13
    $region12: #{_forward_impl.1} parent=1 // pred_region
      %s29 = ssub.s32 1024, 1024
      %30 = vsyncadd [#allocation5], %s29
      %s31 = sshll.u32 [#allocation4], 4
      %s32 = int_to_ptr.vmem [resolvable:$true] %s31
      %37 = dma.hbm_to_vmem [thread:$0]  %s2, 1024, %s32, [#allocation5], 64, 64, 4
    $region13: #{_forward_impl.1} parent=1 // pred_fallthru
      _
    // Predicated region
    $region14: #{_forward_impl.1} parent=1 // pred_check
      _
    $region15: #{_forward_impl.1} parent=1 // pred_check_branch
      %39 = sbr.rel (0) target = $region17
    $region16: #{_forward_impl.1} parent=1 // pred_region
      %40 = dma.done [#allocation3], 1024
    $region17: #{_forward_impl.1} parent=1 // pred_fallthru
      _
    // Predicated region
    $region18: #{_forward_impl.1} parent=1 // pred_check
      _
    $region19: #{_forward_impl.1} parent=1 // pred_check_branch
      %42 = sbr.rel (0) target = $region21
    $region20: #{_forward_impl.1} parent=1 // pred_region
      %43 = dma.done [#allocation5], 1024
    $region21: #{_forward_impl.1} parent=1 // pred_fallthru
      _
    %v45 = vld [vmem:[%s0] sm:$0xf]
    %v46 = vld [vmem:[%s0 + $0x4] sm:$0xf]
    %v47 = vld [vmem:[#allocation2] sm:$0xf]
    %v48 = vld [vmem:[#allocation2 + $0x4] sm:$0xf]
    %v49 = vld [vmem:[#allocation2 + $0x8] sm:$0xf]
    %v50 = vld [vmem:[#allocation2 + $0xc] sm:$0xf]
    %v51 = vld [vmem:[#allocation2 + $0x10] sm:$0xf]
    %v52 = vld [vmem:[#allocation2 + $0x14] sm:$0xf]
    %v53 = vld [vmem:[#allocation2 + $0x18] sm:$0xf]
    %v54 = vld [vmem:[#allocation2 + $0x1c] sm:$0xf]
    %v55 = vld [vmem:[#allocation2 + $0x20] sm:$0xf]
    %v56 = vld [vmem:[#allocation2 + $0x24] sm:$0xf]
    %v57 = vld [vmem:[#allocation2 + $0x28] sm:$0xf]
    %v58 = vld [vmem:[#allocation2 + $0x2c] sm:$0xf]
    %v59 = vld [vmem:[#allocation2 + $0x30] sm:$0xf]
    %v60 = vld [vmem:[#allocation2 + $0x34] sm:$0xf]
    %v61 = vld [vmem:[#allocation2 + $0x38] sm:$0xf]
    %v62 = vld [vmem:[#allocation2 + $0x3c] sm:$0xf]
    %v65 = vunpack.c.l.b16 %v45
    %v66 = vunpack.c.l.b16 %v46
    %v67 = vpack.c.b16 %v66, %v65
    %v85 = vunpack.c.l.b16 %v47
    %v86 = vunpack.c.l.b16 %v48
    %v87 = vunpack.c.l.b16 %v49
    %v88 = vunpack.c.l.b16 %v50
    %v89 = vunpack.c.l.b16 %v51
    %v90 = vunpack.c.l.b16 %v52
    %v91 = vunpack.c.l.b16 %v53
    %v92 = vunpack.c.l.b16 %v54
    %v93 = vunpack.c.l.b16 %v55
    %v94 = vunpack.c.l.b16 %v56
    %v95 = vunpack.c.l.b16 %v57
    %v96 = vunpack.c.l.b16 %v58
    %v97 = vunpack.c.l.b16 %v59
    %v98 = vunpack.c.l.b16 %v60
    %v99 = vunpack.c.l.b16 %v61
    %v100 = vunpack.c.l.b16 %v62
    %v101 = vpack.c.b16 %v86, %v85
    %v102 = vpack.c.b16 %v88, %v87
    %v103 = vpack.c.b16 %v90, %v89
    %v104 = vpack.c.b16 %v92, %v91
    %v105 = vpack.c.b16 %v94, %v93
    %v106 = vpack.c.b16 %v96, %v95
    %v107 = vpack.c.b16 %v98, %v97
    %v108 = vpack.c.b16 %v100, %v99
    %117 = vmatprep.subr.bf16.mxu0 0
    %118 = vmatpush1.bf16.msra.mxu0 %v108
    %119 = vmatprep.subr.bf16.mxu0 0
    %120 = vmatpush1.bf16.msra.mxu0 %v107
    %121 = vmatprep.subr.bf16.mxu0 0
    %122 = vmatpush1.bf16.msra.mxu0 %v106
    %123 = vmatprep.subr.bf16.mxu0 0
    %124 = vmatpush1.bf16.msra.mxu0 %v105
    %125 = vmatprep.subr.bf16.mxu0 0
    %126 = vmatpush1.bf16.msra.mxu0 %v104
    %127 = vmatprep.subr.bf16.mxu0 0
    %128 = vmatpush1.bf16.msra.mxu0 %v103
    %129 = vmatprep.subr.bf16.mxu0 0
    %130 = vmatpush1.bf16.msra.mxu0 %v102
    %131 = vmatprep.subr.bf16.mxu0 0
    %132 = vmatpush1.bf16.msra.mxu0 %v101
    %133 = vmatprep.subr.bf16.mxu0 0
    %134 = vmatpush2.bf16.msra.mxu0 0
    %135 = vmatprep.subr.bf16.mxu0 0
    %136 = vmatpush2.bf16.msra.mxu0 0
    %137 = vmatprep.subr.bf16.mxu0 0
    %138 = vmatpush2.bf16.msra.mxu0 0
    %139 = vmatprep.subr.bf16.mxu0 0
    %140 = vmatpush2.bf16.msra.mxu0 0
    %141 = vmatprep.subr.bf16.mxu0 0
    %142 = vmatpush2.bf16.msra.mxu0 0
    %143 = vmatprep.subr.bf16.mxu0 0
    %144 = vmatpush2.bf16.msra.mxu0 0
    %145 = vmatprep.subr.bf16.mxu0 0
    %146 = vmatpush2.bf16.msra.mxu0 0
    %147 = vmatprep.subr.bf16.mxu0 0
    %148 = vmatpush2.bf16.msra.mxu0 0
    %149 = vmatprep.mubr.bf16.mxu0 0
    %150 = vmatmul.mubr.bf16.gmra.mxu0 %v67
    %v151 = vpop.f32.mrf.mxu0
    %v152 = vadd.f32 0.0, %v151
    %v153 = vpop.f32.mrf.mxu0
    %v154 = vpop.f32.mrf.mxu0
    %v155 = vadd.f32 0.0, %v154
    %v156 = vpop.f32.mrf.mxu0
    %157 = vdwg.mxu0
    %v158 = vlaneseq
    %v159 = vand.u32 %v158, 127
    %vm160 = vcmp.lt.s32.totalorder %v159, 32
    %v161 = vsel %vm160, %v152, -inf
    %v162 = vsel %vm160, %v155, -inf
    %163 = vmax.xlane.f32.xlu0 %v161
    %v164 = vpop.xlane.xlu0 %163
    %165 = vmax.xlane.f32.xlu0 %v162
    %v166 = vpop.xlane.xlu0 %165
    %vm167 = vcmp.eq.f32.partialorder %v161, %v164
    %vm168 = vcmp.eq.f32.partialorder %v162, %v166
    %v169 = vsel %vm167, %v159, 128
    %v170 = vsel %vm168, %v159, 128
    %v171 = vand.u32 %v169, 65535
    %v172 = vshra.s32 %v169, 16
    %v173 = vcvt.s32.f32 %v171
    %v174 = vcvt.s32.f32 %v172
    %175 = vmin.xlane.f32.xlu0 %v174
    %v176 = vpop.xlane.xlu0 %175
    %vm177 = vcmp.eq.f32.partialorder %v174, %v176
    %v178 = vsel %vm177, %v173, inf
    %179 = vmin.xlane.f32.xlu0 %v178
    %v180 = vpop.xlane.xlu0 %179
    %v181 = vcvt.f32.s32 %v180
    %v182 = vcvt.f32.s32 %v176
    %v183 = vshll.u32 %v182, 16
    %v184 = vadd.s32 %v183, %v181
    %v185 = vand.u32 %v170, 65535
    %v186 = vshra.s32 %v170, 16
    %v187 = vcvt.s32.f32 %v185
    %v188 = vcvt.s32.f32 %v186
    %189 = vmin.xlane.f32.xlu0 %v188
    %v190 = vpop.xlane.xlu0 %189
    %vm191 = vcmp.eq.f32.partialorder %v188, %v190
    %v192 = vsel %vm191, %v187, inf
    %193 = vmin.xlane.f32.xlu0 %v192
    %v194 = vpop.xlane.xlu0 %193
    %v195 = vcvt.f32.s32 %v194
    %v196 = vcvt.f32.s32 %v190
    %v197 = vshll.u32 %v196, 16
    %v198 = vadd.s32 %v197, %v195
    %vm199 = vcmp.eq.s32.totalorder %v159, %v184
    %vm200 = vcmp.eq.s32.totalorder %v159, %v198
    %v201 = vsel %vm199, %v152, 0.0
    %v202 = vsel %vm200, %v155, 0.0
    %v203 = vsel %vm199, -inf, %v161
    %v204 = vsel %vm200, -inf, %v162
    %205 = vmax.xlane.f32.xlu0 %v203
    %v206 = vpop.xlane.xlu0 %205
    %207 = vmax.xlane.f32.xlu0 %v204
    %v208 = vpop.xlane.xlu0 %207
    %vm209 = vcmp.eq.f32.partialorder %v203, %v206
    %vm210 = vcmp.eq.f32.partialorder %v204, %v208
    %v211 = vsel %vm209, %v159, 128
    %v212 = vsel %vm210, %v159, 128
    %v213 = vand.u32 %v211, 65535
    %v214 = vshra.s32 %v211, 16
    %v215 = vcvt.s32.f32 %v213
    %v216 = vcvt.s32.f32 %v214
    %217 = vmin.xlane.f32.xlu0 %v216
    %v218 = vpop.xlane.xlu0 %217
    %vm219 = vcmp.eq.f32.partialorder %v216, %v218
    %v220 = vsel %vm219, %v215, inf
    %221 = vmin.xlane.f32.xlu0 %v220
    %v222 = vpop.xlane.xlu0 %221
    %v223 = vcvt.f32.s32 %v222
    %v224 = vcvt.f32.s32 %v218
    %v225 = vshll.u32 %v224, 16
    %v226 = vadd.s32 %v225, %v223
    %v227 = vand.u32 %v212, 65535
    %v228 = vshra.s32 %v212, 16
    %v229 = vcvt.s32.f32 %v227
    %v230 = vcvt.s32.f32 %v228
    %231 = vmin.xlane.f32.xlu0 %v230
    %v232 = vpop.xlane.xlu0 %231
    %vm233 = vcmp.eq.f32.partialorder %v230, %v232
    %v234 = vsel %vm233, %v229, inf
    %235 = vmin.xlane.f32.xlu0 %v234
    %v236 = vpop.xlane.xlu0 %235
    %v237 = vcvt.f32.s32 %v236
    %v238 = vcvt.f32.s32 %v232
    %v239 = vshll.u32 %v238, 16
    %v240 = vadd.s32 %v239, %v237
    %vm241 = vcmp.eq.s32.totalorder %v159, %v226
    %vm242 = vcmp.eq.s32.totalorder %v159, %v240
    %v243 = vsel %vm241, %v152, %v201
    %v244 = vsel %vm242, %v155, %v202
    %v245 = vpack.c.bf16 %v244, %v243
    %v247 = vunpack.c.l.b16 %v245
    %v248 = vunpack.c.h.b16 %v245
    %v249 = vpack.c.b16 %v247, %v247
    %v250 = vpack.c.b16 %v248, %v248
    %253 = vst [vmem:[%s4] sm:$0xf] %v249
    %254 = vst [vmem:[%s4 + $0x4] sm:$0xf] %v250
    %v255 = vld [vmem:[#allocation4] sm:$0xf]
    %v256 = vld [vmem:[#allocation4 + $0x4] sm:$0xf]
    %v257 = vld [vmem:[#allocation4 + $0x8] sm:$0xf]
    %v258 = vld [vmem:[#allocation4 + $0xc] sm:$0xf]
    %v259 = vld [vmem:[#allocation4 + $0x10] sm:$0xf]
    %v260 = vld [vmem:[#allocation4 + $0x14] sm:$0xf]
    %v261 = vld [vmem:[#allocation4 + $0x18] sm:$0xf]
    %v262 = vld [vmem:[#allocation4 + $0x1c] sm:$0xf]
    %v263 = vld [vmem:[#allocation4 + $0x20] sm:$0xf]
    %v264 = vld [vmem:[#allocation4 + $0x24] sm:$0xf]
    %v265 = vld [vmem:[#allocation4 + $0x28] sm:$0xf]
    %v266 = vld [vmem:[#allocation4 + $0x2c] sm:$0xf]
    %v267 = vld [vmem:[#allocation4 + $0x30] sm:$0xf]
    %v268 = vld [vmem:[#allocation4 + $0x34] sm:$0xf]
    %v269 = vld [vmem:[#allocation4 + $0x38] sm:$0xf]
    %v270 = vld [vmem:[#allocation4 + $0x3c] sm:$0xf]
    %v287 = vunpack.c.l.b16 %v255
    %v288 = vunpack.c.l.b16 %v256
    %v289 = vunpack.c.l.b16 %v257
    %v290 = vunpack.c.l.b16 %v258
    %v291 = vunpack.c.l.b16 %v259
    %v292 = vunpack.c.l.b16 %v260
    %v293 = vunpack.c.l.b16 %v261
    %v294 = vunpack.c.l.b16 %v262
    %v295 = vunpack.c.l.b16 %v263
    %v296 = vunpack.c.l.b16 %v264
    %v297 = vunpack.c.l.b16 %v265
    %v298 = vunpack.c.l.b16 %v266
    %v299 = vunpack.c.l.b16 %v267
    %v300 = vunpack.c.l.b16 %v268
    %v301 = vunpack.c.l.b16 %v269
    %v302 = vunpack.c.l.b16 %v270
    %v303 = vpack.c.b16 %v288, %v287
    %v304 = vpack.c.b16 %v290, %v289
    %v305 = vpack.c.b16 %v292, %v291
    %v306 = vpack.c.b16 %v294, %v293
    %v307 = vpack.c.b16 %v296, %v295
    %v308 = vpack.c.b16 %v298, %v297
    %v309 = vpack.c.b16 %v300, %v299
    %v310 = vpack.c.b16 %v302, %v301
    %319 = vmatprep.subr.bf16.mxu0 0
    %320 = vmatpush1.bf16.msra.mxu0 %v310
    %321 = vmatprep.subr.bf16.mxu0 0
    %322 = vmatpush1.bf16.msra.mxu0 %v309
    %323 = vmatprep.subr.bf16.mxu0 0
    %324 = vmatpush1.bf16.msra.mxu0 %v308
    %325 = vmatprep.subr.bf16.mxu0 0
    %326 = vmatpush1.bf16.msra.mxu0 %v307
    %327 = vmatprep.subr.bf16.mxu0 0
    %328 = vmatpush1.bf16.msra.mxu0 %v306
    %329 = vmatprep.subr.bf16.mxu0 0
    %330 = vmatpush1.bf16.msra.mxu0 %v305
    %331 = vmatprep.subr.bf16.mxu0 0
    %332 = vmatpush1.bf16.msra.mxu0 %v304
    %333 = vmatprep.subr.bf16.mxu0 0
    %334 = vmatpush1.bf16.msra.mxu0 %v303
    %335 = vmatprep.subr.bf16.mxu0 0
    %336 = vmatpush2.bf16.msra.mxu0 0
    %337 = vmatprep.subr.bf16.mxu0 0
    %338 = vmatpush2.bf16.msra.mxu0 0
    %339 = vmatprep.subr.bf16.mxu0 0
    %340 = vmatpush2.bf16.msra.mxu0 0
    %341 = vmatprep.subr.bf16.mxu0 0
    %342 = vmatpush2.bf16.msra.mxu0 0
    %343 = vmatprep.subr.bf16.mxu0 0
    %344 = vmatpush2.bf16.msra.mxu0 0
    %345 = vmatprep.subr.bf16.mxu0 0
    %346 = vmatpush2.bf16.msra.mxu0 0
    %347 = vmatprep.subr.bf16.mxu0 0
    %348 = vmatpush2.bf16.msra.mxu0 0
    %349 = vmatprep.subr.bf16.mxu0 0
    %350 = vmatpush2.bf16.msra.mxu0 0
    %351 = vmatprep.mubr.bf16.mxu0 0
    %352 = vmatmul.mubr.bf16.gmra.mxu0 %v245
    %v353 = vpop.f32.mrf.mxu0
    %v354 = vadd.f32 0.0, %v353
    %v355 = vpop.f32.mrf.mxu0
    %v356 = vpop.f32.mrf.mxu0
    %v357 = vadd.f32 0.0, %v356
    %v358 = vpop.f32.mrf.mxu0
    %359 = vdwg.mxu0
    %v360 = vpack.c.bf16 %v357, %v354
    %v362 = vunpack.c.l.b16 %v360
    %v363 = vunpack.c.h.b16 %v360
    %v364 = vpack.c.b16 %v362, %v362
    %v365 = vpack.c.b16 %v363, %v363
    %368 = vst [vmem:[%s3] sm:$0xf] %v364
    %369 = vst [vmem:[%s3 + $0x4] sm:$0xf] %v365
    // Predicated region
    $region22: #{_forward_impl.1} parent=1 // pred_check
      _
    $region23: #{_forward_impl.1} parent=1 // pred_check_branch
      %371 = sbr.rel (0) target = $region25
    $region24: #{_forward_impl.1} parent=1 // pred_region
      _
    $region25: #{_forward_impl.1} parent=1 // pred_fallthru
      _
    // Predicated region
    $region26: #{_forward_impl.1} parent=1 // pred_check
      _
    $region27: #{_forward_impl.1} parent=1 // pred_check_branch
      %373 = sbr.rel (0) target = $region29
    $region28: #{_forward_impl.1} parent=1 // pred_region
      _
    $region29: #{_forward_impl.1} parent=1 // pred_fallthru
      _
    // Predicated region
    $region30: #{_forward_impl.1} parent=1 // pred_check
      _
    $region31: #{_forward_impl.1} parent=1 // pred_check_branch
      %375 = sbr.rel (0) target = $region33
    $region32: #{_forward_impl.1} parent=1 // pred_region
      _
    $region33: #{_forward_impl.1} parent=1 // pred_fallthru
      _
    // Predicated region
    $region34: #{_forward_impl.1} parent=1 // pred_check
      _
    $region35: #{_forward_impl.1} parent=1 // pred_check_branch
      %377 = sbr.rel (0) target = $region37
    $region36: #{_forward_impl.1} parent=1 // pred_region
      _
    $region37: #{_forward_impl.1} parent=1 // pred_fallthru
      _
    %378 = vsyncpa [#allocation3], 1
    %379 = vsyncpa [#allocation5], 1

// kernel: _forward_impl.1
$region0: #{_forward_impl.1}
  #allocation0 [shape = 'u32[]', space=smem, size = 0x4, offset = 0x4, fixed_abs, tag = 'smem constant byte address 0x4 - core index']
  #allocation1 [shape = 'u32[144,128]{1,0:T(1,128)}', space=vmem, size = 0x12000, scoped, tag = 'internal scratch']
  %s0 = inlined_call_operand.vmem [shape: bf16[16,128], index: 0, kind: input, shape index: {}]
  %s1 = inlined_call_operand.hbm [shape: bf16[128,128], index: 1, kind: input, shape index: {}]
  %s2 = inlined_call_operand.hbm [shape: bf16[128,128], index: 2, kind: input, shape index: {}]
  %s3 = inlined_call_operand.vmem [shape: bf16[16,128], index: 3, kind: output, shape index: {0}]
  %s4 = inlined_call_operand.vmem [shape: bf16[16,128], index: 4, kind: output, shape index: {1}]
  %5 = xla_tuple %s3, %s4
  %s6 = sld [smem:[#allocation0]]
  $region38: #{_forward_impl.1} parent=0
    _
  %s8 = ssub.s32 1, %s6
  %s9 = scalar_select 0, %s8, %s6
  $region1: #{_forward_impl.1} parent=0
    #allocation2 [shape = 'u8[32768]{0}', space=vmem, size = 0x8000, scoped, tag = 'input window, operand 1, single buffered']
    #allocation3 [shape = 's32[1]{0}', space=sflag, size = 0x4, scoped, tag = 'scoped memory for _forward_impl.1']
    #allocation4 [shape = 'u8[32768]{0}', space=vmem, size = 0x8000, scoped, tag = 'input window, operand 2, single buffered']
    #allocation5 [shape = 's32[1]{0}', space=sflag, size = 0x4, scoped, tag = 'scoped memory for _forward_impl.1']
    %10 = vsyncpa [#allocation3], 0
    %11 = vsyncpa [#allocation5], 0
    // Predicated region
    $region2: #{_forward_impl.1} parent=1 // pred_check
      _
    $region3: #{_forward_impl.1} parent=1 // pred_check_branch
      %13 = sbr.rel (0) target = $region5
    $region4: #{_forward_impl.1} parent=1 // pred_region
      _
    $region5: #{_forward_impl.1} parent=1 // pred_fallthru
      _
    // Predicated region
    $region6: #{_forward_impl.1} parent=1 // pred_check
      _
    $region7: #{_forward_impl.1} parent=1 // pred_check_branch
      %15 = sbr.rel (0) target = $region9
    $region8: #{_forward_impl.1} parent=1 // pred_region
      %s17 = ssub.s32 1024, 1024
      %18 = vsyncadd [#allocation3], %s17
      %s19 = sshll.u32 [#allocation2], 4
      %s20 = int_to_ptr.vmem [resolvable:$true] %s19
      %25 = dma.hbm_to_vmem [thread:$0]  %s1, 1024, %s20, [#allocation3], 64, 64, 4
    $region9: #{_forward_impl.1} parent=1 // pred_fallthru
      _
    // Predicated region
    $region10: #{_forward_impl.1} parent=1 // pred_check
      _
    $region11: #{_forward_impl.1} parent=1 // pred_check_branch
      %27 = sbr.rel (0) target = $region13
    $region12: #{_forward_impl.1} parent=1 // pred_region
      %s29 = ssub.s32 1024, 1024
      %30 = vsyncadd [#allocation5], %s29
      %s31 = sshll.u32 [#allocation4], 4
      %s32 = int_to_ptr.vmem [resolvable:$true] %s31
      %37 = dma.hbm_to_vmem [thread:$0]  %s2, 1024, %s32, [#allocation5], 64, 64, 4
    $region13: #{_forward_impl.1} parent=1 // pred_fallthru
      _
    // Predicated region
    $region14: #{_forward_impl.1} parent=1 // pred_check
      _
    $region15: #{_forward_impl.1} parent=1 // pred_check_branch
      %39 = sbr.rel (0) target = $region17
    $region16: #{_forward_impl.1} parent=1 // pred_region
      %40 = dma.done [#allocation3], 1024
    $region17: #{_forward_impl.1} parent=1 // pred_fallthru
      _
    // Predicated region
    $region18: #{_forward_impl.1} parent=1 // pred_check
      _
    $region19: #{_forward_impl.1} parent=1 // pred_check_branch
      %42 = sbr.rel (0) target = $region21
    $region20: #{_forward_impl.1} parent=1 // pred_region
      %43 = dma.done [#allocation5], 1024
    $region21: #{_forward_impl.1} parent=1 // pred_fallthru
      _
    %v45 = vld [vmem:[%s0] sm:$0xf]
    %v46 = vld [vmem:[%s0 + $0x4] sm:$0xf]
    %v47 = vld [vmem:[#allocation2] sm:$0xf]
    %v48 = vld [vmem:[#allocation2 + $0x4] sm:$0xf]
    %v49 = vld [vmem:[#allocation2 + $0x8] sm:$0xf]
    %v50 = vld [vmem:[#allocation2 + $0xc] sm:$0xf]
    %v51 = vld [vmem:[#allocation2 + $0x10] sm:$0xf]
    %v52 = vld [vmem:[#allocation2 + $0x14] sm:$0xf]
    %v53 = vld [vmem:[#allocation2 + $0x18] sm:$0xf]
    %v54 = vld [vmem:[#allocation2 + $0x1c] sm:$0xf]
    %v55 = vld [vmem:[#allocation2 + $0x20] sm:$0xf]
    %v56 = vld [vmem:[#allocation2 + $0x24] sm:$0xf]
    %v57 = vld [vmem:[#allocation2 + $0x28] sm:$0xf]
    %v58 = vld [vmem:[#allocation2 + $0x2c] sm:$0xf]
    %v59 = vld [vmem:[#allocation2 + $0x30] sm:$0xf]
    %v60 = vld [vmem:[#allocation2 + $0x34] sm:$0xf]
    %v61 = vld [vmem:[#allocation2 + $0x38] sm:$0xf]
    %v62 = vld [vmem:[#allocation2 + $0x3c] sm:$0xf]
    %v65 = vunpack.c.l.b16 %v45
    %v66 = vunpack.c.l.b16 %v46
    %v67 = vpack.c.b16 %v66, %v65
    %v85 = vunpack.c.l.b16 %v47
    %v86 = vunpack.c.l.b16 %v48
    %v87 = vunpack.c.l.b16 %v49
    %v88 = vunpack.c.l.b16 %v50
    %v89 = vunpack.c.l.b16 %v51
    %v90 = vunpack.c.l.b16 %v52
    %v91 = vunpack.c.l.b16 %v53
    %v92 = vunpack.c.l.b16 %v54
    %v93 = vunpack.c.l.b16 %v55
    %v94 = vunpack.c.l.b16 %v56
    %v95 = vunpack.c.l.b16 %v57
    %v96 = vunpack.c.l.b16 %v58
    %v97 = vunpack.c.l.b16 %v59
    %v98 = vunpack.c.l.b16 %v60
    %v99 = vunpack.c.l.b16 %v61
    %v100 = vunpack.c.l.b16 %v62
    %v101 = vpack.c.b16 %v86, %v85
    %v102 = vpack.c.b16 %v88, %v87
    %v103 = vpack.c.b16 %v90, %v89
    %v104 = vpack.c.b16 %v92, %v91
    %v105 = vpack.c.b16 %v94, %v93
    %v106 = vpack.c.b16 %v96, %v95
    %v107 = vpack.c.b16 %v98, %v97
    %v108 = vpack.c.b16 %v100, %v99
    %117 = vmatprep.subr.bf16.mxu0 0
    %118 = vmatpush1.bf16.msra.mxu0 %v108
    %119 = vmatprep.subr.bf16.mxu0 0
    %120 = vmatpush1.bf16.msra.mxu0 %v107
    %121 = vmatprep.subr.bf16.mxu0 0
    %122 = vmatpush1.bf16.msra.mxu0 %v106
    %123 = vmatprep.subr.bf16.mxu0 0
    %124 = vmatpush1.bf16.msra.mxu0 %v105
    %125 = vmatprep.subr.bf16.mxu0 0
    %126 = vmatpush1.bf16.msra.mxu0 %v104
    %127 = vmatprep.subr.bf16.mxu0 0
    %128 = vmatpush1.bf16.msra.mxu0 %v103
    %129 = vmatprep.subr.bf16.mxu0 0
    %130 = vmatpush1.bf16.msra.mxu0 %v102
    %131 = vmatprep.subr.bf16.mxu0 0
    %132 = vmatpush1.bf16.msra.mxu0 %v101
    %133 = vmatprep.subr.bf16.mxu0 0
    %134 = vmatpush2.bf16.msra.mxu0 0
    %135 = vmatprep.subr.bf16.mxu0 0
    %136 = vmatpush2.bf16.msra.mxu0 0
    %137 = vmatprep.subr.bf16.mxu0 0
    %138 = vmatpush2.bf16.msra.mxu0 0
    %139 = vmatprep.subr.bf16.mxu0 0
    %140 = vmatpush2.bf16.msra.mxu0 0
    %141 = vmatprep.subr.bf16.mxu0 0
    %142 = vmatpush2.bf16.msra.mxu0 0
    %143 = vmatprep.subr.bf16.mxu0 0
    %144 = vmatpush2.bf16.msra.mxu0 0
    %145 = vmatprep.subr.bf16.mxu0 0
    %146 = vmatpush2.bf16.msra.mxu0 0
    %147 = vmatprep.subr.bf16.mxu0 0
    %148 = vmatpush2.bf16.msra.mxu0 0
    %149 = vmatprep.mubr.bf16.mxu0 0
    %150 = vmatmul.mubr.bf16.gmra.mxu0 %v67
    %v151 = vpop.f32.mrf.mxu0
    %v152 = vadd.f32 0.0, %v151
    %v153 = vpop.f32.mrf.mxu0
    %v154 = vpop.f32.mrf.mxu0
    %v155 = vadd.f32 0.0, %v154
    %v156 = vpop.f32.mrf.mxu0
    %157 = vdwg.mxu0
    %v158 = vlaneseq
    %v159 = vand.u32 %v158, 127
    %vm160 = vcmp.lt.s32.totalorder %v159, 32
    %v161 = vsel %vm160, %v152, -inf
    %v162 = vsel %vm160, %v155, -inf
    %163 = vmax.xlane.f32.xlu0 %v161
    %v164 = vpop.xlane.xlu0 %163
    %165 = vmax.xlane.f32.xlu0 %v162
    %v166 = vpop.xlane.xlu0 %165
    %vm167 = vcmp.eq.f32.partialorder %v161, %v164
    %vm168 = vcmp.eq.f32.partialorder %v162, %v166
    %v169 = vsel %vm167, %v159, 128
    %v170 = vsel %vm168, %v159, 128
    %v171 = vand.u32 %v169, 65535
    %v172 = vshra.s32 %v169, 16
    %v173 = vcvt.s32.f32 %v171
    %v174 = vcvt.s32.f32 %v172
    %175 = vmin.xlane.f32.xlu0 %v174
    %v176 = vpop.xlane.xlu0 %175
    %vm177 = vcmp.eq.f32.partialorder %v174, %v176
    %v178 = vsel %vm177, %v173, inf
    %179 = vmin.xlane.f32.xlu0 %v178
    %v180 = vpop.xlane.xlu0 %179
    %v181 = vcvt.f32.s32 %v180
    %v182 = vcvt.f32.s32 %v176
    %v183 = vshll.u32 %v182, 16
    %v184 = vadd.s32 %v183, %v181
    %v185 = vand.u32 %v170, 65535
    %v186 = vshra.s32 %v170, 16
    %v187 = vcvt.s32.f32 %v185
    %v188 = vcvt.s32.f32 %v186
    %189 = vmin.xlane.f32.xlu0 %v188
    %v190 = vpop.xlane.xlu0 %189
    %vm191 = vcmp.eq.f32.partialorder %v188, %v190
    %v192 = vsel %vm191, %v187, inf
    %193 = vmin.xlane.f32.xlu0 %v192
    %v194 = vpop.xlane.xlu0 %193
    %v195 = vcvt.f32.s32 %v194
    %v196 = vcvt.f32.s32 %v190
    %v197 = vshll.u32 %v196, 16
    %v198 = vadd.s32 %v197, %v195
    %vm199 = vcmp.eq.s32.totalorder %v159, %v184
    %vm200 = vcmp.eq.s32.totalorder %v159, %v198
    %v201 = vsel %vm199, %v152, 0.0
    %v202 = vsel %vm200, %v155, 0.0
    %v203 = vsel %vm199, -inf, %v161
    %v204 = vsel %vm200, -inf, %v162
    %205 = vmax.xlane.f32.xlu0 %v203
    %v206 = vpop.xlane.xlu0 %205
    %207 = vmax.xlane.f32.xlu0 %v204
    %v208 = vpop.xlane.xlu0 %207
    %vm209 = vcmp.eq.f32.partialorder %v203, %v206
    %vm210 = vcmp.eq.f32.partialorder %v204, %v208
    %v211 = vsel %vm209, %v159, 128
    %v212 = vsel %vm210, %v159, 128
    %v213 = vand.u32 %v211, 65535
    %v214 = vshra.s32 %v211, 16
    %v215 = vcvt.s32.f32 %v213
    %v216 = vcvt.s32.f32 %v214
    %217 = vmin.xlane.f32.xlu0 %v216
    %v218 = vpop.xlane.xlu0 %217
    %vm219 = vcmp.eq.f32.partialorder %v216, %v218
    %v220 = vsel %vm219, %v215, inf
    %221 = vmin.xlane.f32.xlu0 %v220
    %v222 = vpop.xlane.xlu0 %221
    %v223 = vcvt.f32.s32 %v222
    %v224 = vcvt.f32.s32 %v218
    %v225 = vshll.u32 %v224, 16
    %v226 = vadd.s32 %v225, %v223
    %v227 = vand.u32 %v212, 65535
    %v228 = vshra.s32 %v212, 16
    %v229 = vcvt.s32.f32 %v227
    %v230 = vcvt.s32.f32 %v228
    %231 = vmin.xlane.f32.xlu0 %v230
    %v232 = vpop.xlane.xlu0 %231
    %vm233 = vcmp.eq.f32.partialorder %v230, %v232
    %v234 = vsel %vm233, %v229, inf
    %235 = vmin.xlane.f32.xlu0 %v234
    %v236 = vpop.xlane.xlu0 %235
    %v237 = vcvt.f32.s32 %v236
    %v238 = vcvt.f32.s32 %v232
    %v239 = vshll.u32 %v238, 16
    %v240 = vadd.s32 %v239, %v237
    %vm241 = vcmp.eq.s32.totalorder %v159, %v226
    %vm242 = vcmp.eq.s32.totalorder %v159, %v240
    %v243 = vsel %vm241, %v152, %v201
    %v244 = vsel %vm242, %v155, %v202
    %v245 = vpack.c.bf16 %v244, %v243
    %v247 = vunpack.c.l.b16 %v245
    %v248 = vunpack.c.h.b16 %v245
    %v249 = vpack.c.b16 %v247, %v247
    %v250 = vpack.c.b16 %v248, %v248
    %253 = vst [vmem:[%s4] sm:$0xf] %v249
    %254 = vst [vmem:[%s4 + $0x4] sm:$0xf] %v250
    %v255 = vld [vmem:[#allocation4] sm:$0xf]
    %v256 = vld [vmem:[#allocation4 + $0x4] sm:$0xf]
    %v257 = vld [vmem:[#allocation4 + $0x8] sm:$0xf]
    %v258 = vld [vmem:[#allocation4 + $0xc] sm:$0xf]
    %v259 = vld [vmem:[#allocation4 + $0x10] sm:$0xf]
    %v260 = vld [vmem:[#allocation4 + $0x14] sm:$0xf]
    %v261 = vld [vmem:[#allocation4 + $0x18] sm:$0xf]
    %v262 = vld [vmem:[#allocation4 + $0x1c] sm:$0xf]
    %v263 = vld [vmem:[#allocation4 + $0x20] sm:$0xf]
    %v264 = vld [vmem:[#allocation4 + $0x24] sm:$0xf]
    %v265 = vld [vmem:[#allocation4 + $0x28] sm:$0xf]
    %v266 = vld [vmem:[#allocation4 + $0x2c] sm:$0xf]
    %v267 = vld [vmem:[#allocation4 + $0x30] sm:$0xf]
    %v268 = vld [vmem:[#allocation4 + $0x34] sm:$0xf]
    %v269 = vld [vmem:[#allocation4 + $0x38] sm:$0xf]
    %v270 = vld [vmem:[#allocation4 + $0x3c] sm:$0xf]
    %v287 = vunpack.c.l.b16 %v255
    %v288 = vunpack.c.l.b16 %v256
    %v289 = vunpack.c.l.b16 %v257
    %v290 = vunpack.c.l.b16 %v258
    %v291 = vunpack.c.l.b16 %v259
    %v292 = vunpack.c.l.b16 %v260
    %v293 = vunpack.c.l.b16 %v261
    %v294 = vunpack.c.l.b16 %v262
    %v295 = vunpack.c.l.b16 %v263
    %v296 = vunpack.c.l.b16 %v264
    %v297 = vunpack.c.l.b16 %v265
    %v298 = vunpack.c.l.b16 %v266
    %v299 = vunpack.c.l.b16 %v267
    %v300 = vunpack.c.l.b16 %v268
    %v301 = vunpack.c.l.b16 %v269
    %v302 = vunpack.c.l.b16 %v270
    %v303 = vpack.c.b16 %v288, %v287
    %v304 = vpack.c.b16 %v290, %v289
    %v305 = vpack.c.b16 %v292, %v291
    %v306 = vpack.c.b16 %v294, %v293
    %v307 = vpack.c.b16 %v296, %v295
    %v308 = vpack.c.b16 %v298, %v297
    %v309 = vpack.c.b16 %v300, %v299
    %v310 = vpack.c.b16 %v302, %v301
    %319 = vmatprep.subr.bf16.mxu0 0
    %320 = vmatpush1.bf16.msra.mxu0 %v310
    %321 = vmatprep.subr.bf16.mxu0 0
    %322 = vmatpush1.bf16.msra.mxu0 %v309
    %323 = vmatprep.subr.bf16.mxu0 0
    %324 = vmatpush1.bf16.msra.mxu0 %v308
    %325 = vmatprep.subr.bf16.mxu0 0
    %326 = vmatpush1.bf16.msra.mxu0 %v307
    %327 = vmatprep.subr.bf16.mxu0 0
    %328 = vmatpush1.bf16.msra.mxu0 %v306
    %329 = vmatprep.subr.bf16.mxu0 0
    %330 = vmatpush1.bf16.msra.mxu0 %v305
    %331 = vmatprep.subr.bf16.mxu0 0
    %332 = vmatpush1.bf16.msra.mxu0 %v304
    %333 = vmatprep.subr.bf16.mxu0 0
    %334 = vmatpush1.bf16.msra.mxu0 %v303
    %335 = vmatprep.subr.bf16.mxu0 0
    %336 = vmatpush2.bf16.msra.mxu0 0
    %337 = vmatprep.subr.bf16.mxu0 0
    %338 = vmatpush2.bf16.msra.mxu0 0
    %339 = vmatprep.subr.bf16.mxu0 0
    %340 = vmatpush2.bf16.msra.mxu0 0
    %341 = vmatprep.subr.bf16.mxu0 0
    %342 = vmatpush2.bf16.msra.mxu0 0
    %343 = vmatprep.subr.bf16.mxu0 0
    %344 = vmatpush2.bf16.msra.mxu0 0
    %345 = vmatprep.subr.bf16.mxu0 0
    %346 = vmatpush2.bf16.msra.mxu0 0
    %347 = vmatprep.subr.bf16.mxu0 0
    %348 = vmatpush2.bf16.msra.mxu0 0
    %349 = vmatprep.subr.bf16.mxu0 0
    %350 = vmatpush2.bf16.msra.mxu0 0
    %351 = vmatprep.mubr.bf16.mxu0 0
    %352 = vmatmul.mubr.bf16.gmra.mxu0 %v245
    %v353 = vpop.f32.mrf.mxu0
    %v354 = vadd.f32 0.0, %v353
    %v355 = vpop.f32.mrf.mxu0
    %v356 = vpop.f32.mrf.mxu0
    %v357 = vadd.f32 0.0, %v356
    %v358 = vpop.f32.mrf.mxu0
    %359 = vdwg.mxu0
    %v360 = vpack.c.bf16 %v357, %v354
    %v362 = vunpack.c.l.b16 %v360
    %v363 = vunpack.c.h.b16 %v360
    %v364 = vpack.c.b16 %v362, %v362
    %v365 = vpack.c.b16 %v363, %v363
    %368 = vst [vmem:[%s3] sm:$0xf] %v364
    %369 = vst [vmem:[%s3 + $0x4] sm:$0xf] %v365
    // Predicated region
    $region22: #{_forward_impl.1} parent=1 // pred_check
      _
    $region23: #{_forward_impl.1} parent=1 // pred_check_branch
      %371 = sbr.rel (0) target = $region25
    $region24: #{_forward_impl.1} parent=1 // pred_region
      _
    $region25: #{_forward_impl.1} parent=1 // pred_fallthru
      _
    // Predicated region
    $region26: #{_forward_impl.1} parent=1 // pred_check
      _
    $region27: #{_forward_impl.1} parent=1 // pred_check_branch
      %373 = sbr.rel (0) target = $region29
    $region28: #{_forward_impl.1} parent=1 // pred_region
      _
    $region29: #{_forward_impl.1} parent=1 // pred_fallthru
      _
    // Predicated region
    $region30: #{_forward_impl.1} parent=1 // pred_check
      _
    $region31: #{_forward_impl.1} parent=1 // pred_check_branch
      %375 = sbr.rel (0) target = $region33
    $region32: #{_forward_impl.1} parent=1 // pred_region
      _
    $region33: #{_forward_impl.1} parent=1 // pred_fallthru
      _
    // Predicated region
    $region34: #{_forward_impl.1} parent=1 // pred_check
      _
    $region35: #{_forward_impl.1} parent=1 // pred_check_branch
      %377 = sbr.rel (0) target = $region37
    $region36: #{_forward_impl.1} parent=1 // pred_region
      _
    $region37: #{_forward_impl.1} parent=1 // pred_fallthru
      _
    %378 = vsyncpa [#allocation3], 1
    %379 = vsyncpa [#allocation5], 1

</llo_original>
